<compile_context>
chip_gen: v7x
topology: tpu7x:2x2x1
jax: 0.10.0
libtpu: 0.0.40
codegen_flags: <defaults>
</compile_context>

<pallas_src>
import math

import jax
import jax.numpy as jnp
from jax import lax
from jax.experimental import pallas as pl
from jax.experimental.pallas import tpu as pltpu


def _clip_logits_kernel(scale_ref, img_ref, txt_ref, out_ref):
    # scale_ref : SMEM (1, 1) f32   -- exp(logit_scale), replicated to every grid step
    # img_ref   : VMEM (bm, D)      -- image-feature block (rows i*bm .. )
    # txt_ref   : VMEM (bn, D)      -- text-feature  block (rows j*bn .. )
    # out_ref   : VMEM (bm, bn)     -- logits block
    img = img_ref[...].astype(jnp.float32)
    txt = txt_ref[...].astype(jnp.float32)

    # Row-wise L2 normalization (rsqrt keeps the division off the critical VALU path;
    # the maximum() only guards rsqrt(0) on zero-padded remainder rows — a no-op for real data).
    img_n = img * lax.rsqrt(
        jnp.maximum(jnp.sum(img * img, axis=-1, keepdims=True), 1e-30))
    txt_n = txt * lax.rsqrt(
        jnp.maximum(jnp.sum(txt * txt, axis=-1, keepdims=True), 1e-30))

    # (bm, D) x (bn, D)^T -> (bm, bn) on the MXU, contracting the feature axis directly
    # (no explicit transpose materialized).
    logits = lax.dot_general(
        img_n, txt_n,
        dimension_numbers=(((1,), (1,)), ((), ())),
        preferred_element_type=jnp.float32,
    )
    out_ref[...] = (scale_ref[0, 0] * logits).astype(out_ref.dtype)


def simple_clip_forward(image_features, text_features, logit_scale,
                        *, bm=128, bn=128, out_dtype=jnp.float32):
    """logits = exp(logit_scale) * normalize(image_features) @ normalize(text_features).T

    image_features: (B, D)       -- output of the (frozen) image encoder, bf16/fp32
    text_features : (n_cls, D)   -- frozen text_embds buffer, bf16/fp32
    logit_scale   : scalar       -- learnable log temperature
    """
    b, d = image_features.shape
    n_cls, d2 = text_features.shape
    assert d == d2, (d, d2)

    # Block many rows / classes per grid step: per-step pipeline overhead is ~0.35us,
    # so tiny one-row blocks would be pure overhead. 128x512 bf16 feature blocks +
    # a 128x128 f32 output block are <<1 MiB double-buffered, safely inside the
    # default scoped VMEM on v5e (16 MiB) / v6e (32 MiB) / v7x (32 of 64 MiB).
    bm = min(bm, b)
    bn = min(bn, n_cls)

    # exp() of the single learnable scalar is done as a plain XLA scalar op; the
    # resulting scale rides into the kernel through SMEM.
    scale = jnp.exp(jnp.asarray(logit_scale, jnp.float32)).reshape(1, 1)

    grid = (pl.cdiv(b, bm), pl.cdiv(n_cls, bn))
    return pl.pallas_call(
        _clip_logits_kernel,
        out_shape=jax.ShapeDtypeStruct((b, n_cls), out_dtype),
        grid=grid,
        in_specs=[
            pl.BlockSpec(memory_space=pltpu.MemorySpace.SMEM),   # exp(logit_scale), whole array
            pl.BlockSpec((bm, d), lambda i, j: (i, 0)),          # image-feature rows
            pl.BlockSpec((bn, d), lambda i, j: (j, 0)),          # text-feature rows
        ],
        out_specs=pl.BlockSpec((bm, bn), lambda i, j: (i, j)),
        compiler_params=pltpu.CompilerParams(
            # Both grid axes are independent -> shard across the 2 TCs on v7x; no-op on v5e/v6e.
            dimension_semantics=("parallel", "parallel"),
        ),
    )(scale, image_features, text_features)


if __name__ == "__main__":
    # Small deterministic setup consistent with the module:
    #   B images, n_cls class prompts, feature dim D (lane-dense multiple of 128;
    #   real CLIP uses D=512/1024). Features stored in bf16 (CLIP runs fp16-ish),
    #   logits produced in f32.
    B, n_cls, D = 8, 16, 128

    key = jax.random.PRNGKey(0)
    k_img, k_txt = jax.random.split(key, 2)

    # TODO(synk): in the real model these come from clip_model.visual(image) and
    # clip_model.encode_text(tokenize(classnames)); synthesized here.
    image_features = jax.random.normal(k_img, (B, D), dtype=jnp.float32).astype(jnp.bfloat16)
    text_features = jax.random.normal(k_txt, (n_cls, D), dtype=jnp.float32).astype(jnp.bfloat16)
    logit_scale = jnp.float32(math.log(1.0 / 0.07))   # CLIP's logit_scale init

    logits = simple_clip_forward(image_features, text_features, logit_scale)
    logits = jax.block_until_ready(logits)

    # Pure-JAX reference mirroring the PyTorch forward.
    img32 = image_features.astype(jnp.float32)
    txt32 = text_features.astype(jnp.float32)
    img_n = img32 / jnp.linalg.norm(img32, axis=-1, keepdims=True)
    txt_n = txt32 / jnp.linalg.norm(txt32, axis=-1, keepdims=True)
    ref = jnp.exp(jnp.float32(logit_scale)) * (img_n @ txt_n.T)

    assert logits.shape == (B, n_cls), logits.shape
    assert logits.dtype == jnp.float32
    assert jnp.allclose(logits, ref, atol=1e-3, rtol=1e-3), \
        f"mismatch vs reference, max abs diff {jnp.max(jnp.abs(logits - ref))}"

    print("KERNEL_OK")
</pallas_src>

<mosaic_0001>
module attributes {stable_mosaic.version = 11 : i64} {
  func.func @_clip_logits_kernel(%arg0: i32, %arg1: i32, %arg2: memref<1x1xf32, #tpu.memory_space<smem>>, %arg3: memref<8x128xbf16, #tpu.memory_space<vmem>>, %arg4: memref<16x128xbf16, #tpu.memory_space<vmem>>, %arg5: memref<8x16xf32, #tpu.memory_space<vmem>>) attributes {dimension_semantics = [#tpu.dimension_semantics<parallel>, #tpu.dimension_semantics<parallel>], iteration_bounds = array<i64: 1, 1>, scalar_prefetch = 0 : i64, scratch_operands = 0 : i64, tpu.core_type = #tpu.core_type<tc>, window_params = [{transform_indices = @transform_0, window_bounds = array<i64: 1, 1>}, {transform_indices = @transform_1, window_bounds = array<i64: 8, 128>}, {transform_indices = @transform_2, window_bounds = array<i64: 16, 128>}, {transform_indices = @transform_3, window_bounds = array<i64: 8, 16>}]} {
    %c0 = arith.constant 0 : index
    %c0_0 = arith.constant 0 : index
    %0 = vector.load %arg3[%c0, %c0_0] : memref<8x128xbf16, #tpu.memory_space<vmem>>, vector<8x128xbf16>
    %1 = arith.extf %0 : vector<8x128xbf16> to vector<8x128xf32>
    %c0_1 = arith.constant 0 : index
    %c0_2 = arith.constant 0 : index
    %2 = vector.load %arg4[%c0_1, %c0_2] : memref<16x128xbf16, #tpu.memory_space<vmem>>, vector<16x128xbf16>
    %3 = arith.extf %2 : vector<16x128xbf16> to vector<16x128xf32>
    %4 = arith.mulf %1, %1 : vector<8x128xf32>
    %cst = arith.constant dense<0.000000e+00> : vector<8xf32>
    %5 = vector.multi_reduction <add>, %4, %cst [1] : vector<8x128xf32> to vector<8xf32>
    %6 = vector.shape_cast %5 : vector<8xf32> to vector<8x1xf32>
    %cst_3 = arith.constant 1.000000e-30 : f32
    %7 = vector.broadcast %cst_3 : f32 to vector<8x1xf32>
    %8 = arith.maximumf %6, %7 : vector<8x1xf32>
    %9 = math.rsqrt %8 : vector<8x1xf32>
    %10 = vector.broadcast %9 : vector<8x1xf32> to vector<8x128xf32>
    %11 = arith.mulf %1, %10 : vector<8x128xf32>
    %12 = arith.mulf %3, %3 : vector<16x128xf32>
    %cst_4 = arith.constant dense<0.000000e+00> : vector<16xf32>
    %13 = vector.multi_reduction <add>, %12, %cst_4 [1] : vector<16x128xf32> to vector<16xf32>
    %14 = vector.shape_cast %13 : vector<16xf32> to vector<16x1xf32>
    %cst_5 = arith.constant 1.000000e-30 : f32
    %15 = vector.broadcast %cst_5 : f32 to vector<16x1xf32>
    %16 = arith.maximumf %14, %15 : vector<16x1xf32>
    %17 = math.rsqrt %16 : vector<16x1xf32>
    %18 = vector.broadcast %17 : vector<16x1xf32> to vector<16x128xf32>
    %19 = arith.mulf %3, %18 : vector<16x128xf32>
    %cst_6 = arith.constant dense<0.000000e+00> : vector<8x16xf32>
    %20 = tpu.matmul %11, %19, %cst_6 {dimension_numbers = #tpu.dot_dimension_numbers<[1], [1], [0], [0], [0, 0, 1, 0], [], []>} : vector<8x128xf32>, vector<16x128xf32>, vector<8x16xf32> -> vector<8x16xf32>
    %c0_7 = arith.constant 0 : index
    %c0_8 = arith.constant 0 : index
    %21 = memref.load %arg2[%c0_7, %c0_8] : memref<1x1xf32, #tpu.memory_space<smem>>
    %22 = vector.broadcast %21 : f32 to vector<8x16xf32>
    %23 = arith.mulf %22, %20 : vector<8x16xf32>
    %c0_9 = arith.constant 0 : index
    %c0_10 = arith.constant 0 : index
    %24 = vector.load %arg5[%c0_9, %c0_10] : memref<8x16xf32, #tpu.memory_space<vmem>>, vector<8x16xf32>
    tpu.vector_store %arg5[%c0_9, %c0_10], %23 {strides = array<i32>} : memref<8x16xf32, #tpu.memory_space<vmem>>, vector<8x16xf32>,
    return
  }
  func.func @transform_0(%arg0: i32, %arg1: i32) -> (i32, i32) {
    %c0_i32 = arith.constant 0 : i32
    %c0_i32_0 = arith.constant 0 : i32
    %c0_i32_1 = arith.constant 0 : i32
    return %c0_i32, %c0_i32_0 : i32, i32
  }
  func.func @transform_1(%arg0: i32, %arg1: i32) -> (i32, i32) {
    %c0_i32 = arith.constant 0 : i32
    %c0_i32_0 = arith.constant 0 : i32
    return %arg0, %c0_i32 : i32, i32
  }
  func.func @transform_2(%arg0: i32, %arg1: i32) -> (i32, i32) {
    %c0_i32 = arith.constant 0 : i32
    %c0_i32_0 = arith.constant 0 : i32
    return %arg1, %c0_i32 : i32, i32
  }
  func.func @transform_3(%arg0: i32, %arg1: i32) -> (i32, i32) {
    %c0_i32 = arith.constant 0 : i32
    return %arg0, %arg1 : i32, i32
  }
}

</mosaic_0001>

<llo_original>
// kernel: tpu_custom_call.1
$region0: #{tpu_custom_call.1}
  #allocation0 [shape = 'u32[]', space=smem, size = 0x4, offset = 0x4, fixed_abs, tag = 'smem constant byte address 0x4 - core index']
  #allocation1 [shape = 'u32[144,128]{1,0:T(1,128)}', space=vmem, size = 0x12000, scoped, tag = 'internal scratch']
  #allocation2 [shape = 'f32[1,1]{1,0:T(1,128)S(6)}', space=smem, size = 0x200, scoped, tag = 'scoped memory for tpu_custom_call.1']
  %s0 = inlined_call_operand.<no memory space> [shape: f32[1,1], index: 0, kind: input, shape index: {}]
  %s1 = inlined_call_operand.hbm [shape: bf16[8,128], index: 1, kind: input, shape index: {}]
  %s2 = inlined_call_operand.hbm [shape: bf16[16,128], index: 2, kind: input, shape index: {}]
  %s3 = inlined_call_operand.hbm [shape: f32[8,16], index: 3, kind: output, shape index: {}]
  %s4 = sld [smem:[#allocation0]]
  $region30: #{tpu_custom_call.1} parent=0
    _
  %s6 = ssub.s32 1, %s4
  %s7 = scalar_select 0, %s6, %s4
  %8 = sst [smem:[#allocation2]] %s0
  $region1: #{tpu_custom_call.1} parent=0
    #allocation3 [shape = 'u8[2048]{0}', space=vmem, size = 0x800, scoped, tag = 'input window, operand 1, single buffered']
    #allocation4 [shape = 's32[1]{0}', space=sflag, size = 0x4, scoped, tag = 'scoped memory for tpu_custom_call.1']
    #allocation5 [shape = 's32[1]{0}', space=sflag, size = 0x4, scoped, tag = 'scoped memory for tpu_custom_call.1']
    #allocation6 [shape = 'u8[4096]{0}', space=vmem, size = 0x1000, scoped, tag = 'input window, operand 2, single buffered']
    #allocation7 [shape = 's32[1]{0}', space=sflag, size = 0x4, scoped, tag = 'scoped memory for tpu_custom_call.1']
    #allocation8 [shape = 'u8[4096]{0}', space=vmem, size = 0x1000, scoped, tag = 'output window, operand 0, single buffered']
    %9 = vsyncpa [#allocation4], 0
    %10 = vsyncpa [#allocation7], 0
    %11 = vsyncpa [#allocation5], 0
    // Predicated region
    $region2: #{tpu_custom_call.1} parent=1 // pred_check
      _
    $region3: #{tpu_custom_call.1} parent=1 // pred_check_branch
      %13 = sbr.rel (0) target = $region5
    $region4: #{tpu_custom_call.1} parent=1 // pred_region
      _
    $region5: #{tpu_custom_call.1} parent=1 // pred_fallthru
      _
    // Predicated region
    $region6: #{tpu_custom_call.1} parent=1 // pred_check
      _
    $region7: #{tpu_custom_call.1} parent=1 // pred_check_branch
      %15 = sbr.rel (0) target = $region9
    $region8: #{tpu_custom_call.1} parent=1 // pred_region
      %s17 = ssub.s32 64, 64
      %18 = vsyncadd [#allocation4], %s17
      %s20 = sshll.u32 [#allocation3], 4
      %s21 = int_to_ptr.vmem [resolvable:$true] %s20
      %23 = dma.hbm_to_vmem [thread:$0]  %s1, 64, %s21, [#allocation4]
    $region9: #{tpu_custom_call.1} parent=1 // pred_fallthru
      _
    // Predicated region
    $region10: #{tpu_custom_call.1} parent=1 // pred_check
      _
    $region11: #{tpu_custom_call.1} parent=1 // pred_check_branch
      %25 = sbr.rel (0) target = $region13
    $region12: #{tpu_custom_call.1} parent=1 // pred_region
      %s27 = ssub.s32 128, 128
      %28 = vsyncadd [#allocation7], %s27
      %s29 = sshll.u32 [#allocation6], 4
      %s30 = int_to_ptr.vmem [resolvable:$true] %s29
      %35 = dma.hbm_to_vmem [thread:$0]  %s2, 128, %s30, [#allocation7], 64, 64, 4
    $region13: #{tpu_custom_call.1} parent=1 // pred_fallthru
      _
    // Predicated region
    $region14: #{tpu_custom_call.1} parent=1 // pred_check
      _
    $region15: #{tpu_custom_call.1} parent=1 // pred_check_branch
      %37 = sbr.rel (0) target = $region17
    $region16: #{tpu_custom_call.1} parent=1 // pred_region
      %38 = dma.done [#allocation4], 64
    $region17: #{tpu_custom_call.1} parent=1 // pred_fallthru
      _
    // Predicated region
    $region18: #{tpu_custom_call.1} parent=1 // pred_check
      _
    $region19: #{tpu_custom_call.1} parent=1 // pred_check_branch
      %40 = sbr.rel (0) target = $region21
    $region20: #{tpu_custom_call.1} parent=1 // pred_region
      %41 = dma.done [#allocation7], 128
    $region21: #{tpu_custom_call.1} parent=1 // pred_fallthru
      _
    %v42 = vld [vmem:[#allocation3] sm:$0xf]
    %v43 = vunpack.c.l.bf16 %v42
    %v44 = vld [vmem:[#allocation6] sm:$0xf]
    %v45 = vld [vmem:[#allocation6 + $0x4] sm:$0xf]
    %v46 = vunpack.c.l.bf16 %v44
    %v47 = vunpack.c.l.bf16 %v45
    %v48 = vmul.f32 %v43, %v43
    %49 = vadd.xlane.f32.xlu0 %v48
    %v50 = vpop.xlane.xlu0 %49
    %v51 = vmax.f32 %v50, 1e-30
    %v52 = vrsqrt.pop %v51
    %v53 = vmul.f32 %v43, %v52
    %v54 = vmul.f32 %v46, %v46
    %v55 = vmul.f32 %v47, %v47
    %56 = vadd.xlane.f32.xlu0 %v54
    %v57 = vpop.xlane.xlu0 %56
    %58 = vadd.xlane.f32.xlu0 %v55
    %v59 = vpop.xlane.xlu0 %58
    %v60 = vmax.f32 %v57, 1e-30
    %v61 = vmax.f32 %v59, 1e-30
    %v62 = vrsqrt.pop %v60
    %v63 = vrsqrt.pop %v61
    %v64 = vmul.f32 %v46, %v62
    %v65 = vmul.f32 %v47, %v63
    %66 = vmatprep.subr.mxu0 0.0
    %67 = vmatpush1.xpose.msra.mxu0 %v64
    %68 = vmatprep.subr.mxu0 0.0
    %69 = vmatpush1.xpose.msra.mxu0 %v65
    %70 = vmatprep.subr.mxu0 0.0
    %71 = vmatpush1.xpose.msra.mxu0 0.0
    %72 = vmatprep.subr.mxu0 0.0
    %73 = vmatpush1.xpose.msra.mxu0 0.0
    %74 = vmatprep.subr.mxu0 0.0
    %75 = vmatpush1.xpose.msra.mxu0 0.0
    %76 = vmatprep.subr.mxu0 0.0
    %77 = vmatpush1.xpose.msra.mxu0 0.0
    %78 = vmatprep.subr.mxu0 0.0
    %79 = vmatpush1.xpose.msra.mxu0 0.0
    %80 = vmatprep.subr.mxu0 0.0
    %81 = vmatpush1.xpose.msra.mxu0 0.0
    %82 = vmatprep.subr.mxu0 0.0
    %83 = vmatpush1.xpose.msra.mxu0 0.0
    %84 = vmatprep.subr.mxu0 0.0
    %85 = vmatpush1.xpose.msra.mxu0 0.0
    %86 = vmatprep.subr.mxu0 0.0
    %87 = vmatpush1.xpose.msra.mxu0 0.0
    %88 = vmatprep.subr.mxu0 0.0
    %89 = vmatpush1.xpose.msra.mxu0 0.0
    %90 = vmatprep.subr.mxu0 0.0
    %91 = vmatpush1.xpose.msra.mxu0 0.0
    %92 = vmatprep.subr.mxu0 0.0
    %93 = vmatpush1.xpose.msra.mxu0 0.0
    %94 = vmatprep.subr.mxu0 0.0
    %95 = vmatpush1.xpose.msra.mxu0 0.0
    %96 = vmatprep.subr.mxu0 0.0
    %97 = vmatpush1.xpose.msra.mxu0 0.0
    %98 = vmatprep.subr.mxu0 0.0
    %99 = vmatpush1.xpose.msra.mxu0 0.0
    %100 = vmatprep.subr.mxu0 0.0
    %101 = vmatpush1.xpose.msra.mxu0 0.0
    %102 = vmatprep.subr.mxu0 0.0
    %103 = vmatpush1.xpose.msra.mxu0 0.0
    %104 = vmatprep.subr.mxu0 0.0
    %105 = vmatpush1.xpose.msra.mxu0 0.0
    %106 = vmatprep.subr.mxu0 0.0
    %107 = vmatpush1.xpose.msra.mxu0 0.0
    %108 = vmatprep.subr.mxu0 0.0
    %109 = vmatpush1.xpose.msra.mxu0 0.0
    %110 = vmatprep.subr.mxu0 0.0
    %111 = vmatpush1.xpose.msra.mxu0 0.0
    %112 = vmatprep.subr.mxu0 0.0
    %113 = vmatpush1.xpose.msra.mxu0 0.0
    %114 = vmatprep.subr.mxu0 0.0
    %115 = vmatpush1.xpose.msra.mxu0 0.0
    %116 = vmatprep.subr.mxu0 0.0
    %117 = vmatpush1.xpose.msra.mxu0 0.0
    %118 = vmatprep.subr.mxu0 0.0
    %119 = vmatpush1.xpose.msra.mxu0 0.0
    %120 = vmatprep.subr.mxu0 0.0
    %121 = vmatpush1.xpose.msra.mxu0 0.0
    %122 = vmatprep.subr.mxu0 0.0
    %123 = vmatpush1.xpose.msra.mxu0 0.0
    %124 = vmatprep.subr.mxu0 0.0
    %125 = vmatpush1.xpose.msra.mxu0 0.0
    %126 = vmatprep.subr.mxu0 0.0
    %127 = vmatpush1.xpose.msra.mxu0 0.0
    %128 = vmatprep.subr.mxu0 0.0
    %129 = vmatpush1.xpose.msra.mxu0 0.0
    %130 = vmatprep.mubr.f32.mxu0 0.0
    %131 = vmatmul.mubr.f32.gmra.mrb[0].mxu0 %v53
    %v132 = vpop.f32.mrb[0].mxu0
    %v133 = vadd.f32 0.0, %v132
    %v134 = vpop.f32.mrb[0].mxu0
    %135 = vdwg.mxu0
    %s136 = sld [smem:[#allocation2]]
    %v137 = vstv %s136
    %v138 = vmul.f32 %v137, %v133
    %vm139 = vcmask 130048
    %140 = vst.msk [vmem:[#allocation8] sm:$0xff] %vm139, %v138
    // Predicated region
    $region22: #{tpu_custom_call.1} parent=1 // pred_check
      _
    $region23: #{tpu_custom_call.1} parent=1 // pred_check_branch
      %142 = sbr.rel (0) target = $region25
    $region24: #{tpu_custom_call.1} parent=1 // pred_region
      %s144 = ssub.s32 128, 128
      %145 = vsyncadd [#allocation5], %s144
      %s147 = sshll.u32 [#allocation8], 4
      %s148 = int_to_ptr.vmem [resolvable:$true] %s147
      %150 = dma.vmem_to_hbm [thread:$0]  %s148, 128, %s3, [#allocation5]
    $region25: #{tpu_custom_call.1} parent=1 // pred_fallthru
      _
    // Predicated region
    $region26: #{tpu_custom_call.1} parent=1 // pred_check
      _
    $region27: #{tpu_custom_call.1} parent=1 // pred_check_branch
      %152 = sbr.rel (0) target = $region29
    $region28: #{tpu_custom_call.1} parent=1 // pred_region
      %153 = dma.done [#allocation5], 128
    $region29: #{tpu_custom_call.1} parent=1 // pred_fallthru
      _
    %154 = vsyncpa [#allocation4], 1
    %155 = vsyncpa [#allocation7], 1
    %156 = vsyncpa [#allocation5], 1

</llo_original>
